<compile_context>
chip_gen: v6e
topology: v6e:2x2x1
jax: 0.10.0
libtpu: 0.0.40
codegen_flags: <defaults>
</compile_context>

<pallas_src>
import functools

import jax
import jax.numpy as jnp
from jax.experimental import pallas as pl
from jax.experimental.pallas import tpu as pltpu


def _clamp_kernel(x_ref, o_ref, *, min_val, max_val):
    # min_val/max_val are Python floats -> inlined literals, weak-typed, so the
    # clip stays in the input dtype (no fp32 upcast of bf16 vregs).
    x = x_ref[...]
    o_ref[...] = jnp.clip(x, min_val, max_val).astype(o_ref.dtype)


def _round_up(v, m):
    return ((v + m - 1) // m) * m


def clamp_pallas(x, min_val=-1.0, max_val=1.0, *, target_block_bytes=4 << 20):
    """Elementwise clamp of an arbitrary-shaped tensor via a Pallas TPU kernel."""
    orig_shape = x.shape
    dtype = x.dtype
    n = x.size
    if n == 0:
        return x

    itemsize = jnp.dtype(dtype).itemsize

    # --- Pick a lane-dense last dimension -------------------------------------
    # Prefer a wide multiple of 128 that divides n exactly (no padding copy).
    lane = None
    for cand in (4096, 2048, 1024, 512, 256, 128):
        if n % cand == 0:
            lane = cand
            break

    x_flat = jnp.ravel(x)
    if lane is None:
        # Must pad anyway; pad to a wide lane multiple (pad amount < lane elems).
        lane = 1024
        n_pad = _round_up(n, lane)
        x_flat = jnp.pad(x_flat, (0, n_pad - n))
    else:
        n_pad = n

    rows = n_pad // lane
    x2d = x_flat.reshape(rows, lane)

    # --- Pick block rows: ~target_block_bytes per buffer -----------------------
    row_bytes = lane * itemsize
    if rows * row_bytes <= target_block_bytes:
        if rows >= 16:
            # Whole slab fits one block, but split into >=2 blocks so both
            # TensorCores on v7x get work.
            tile_rows = min(rows, _round_up(-(-rows // 2), 8))
        else:
            tile_rows = rows  # single block; full-extent row dim is always legal
    else:
        tile_rows = max(8, (target_block_bytes // row_bytes) // 8 * 8)

    grid = (pl.cdiv(rows, tile_rows),)

    kernel = functools.partial(
        _clamp_kernel, min_val=float(min_val), max_val=float(max_val)
    )

    out2d = pl.pallas_call(
        kernel,
        out_shape=jax.ShapeDtypeStruct((rows, lane), dtype),
        grid_spec=pltpu.PrefetchScalarGridSpec(
            num_scalar_prefetch=0,
            grid=grid,
            in_specs=[pl.BlockSpec((tile_rows, lane), lambda i: (i, 0))],
            out_specs=pl.BlockSpec((tile_rows, lane), lambda i: (i, 0)),
        ),
        compiler_params=pltpu.CompilerParams(
            dimension_semantics=("parallel",),
            vmem_limit_bytes=32 * 1024 * 1024,
        ),
        cost_estimate=pl.CostEstimate(
            flops=2 * n_pad,
            transcendentals=0,
            bytes_accessed=2 * n_pad * itemsize,
        ),
    )(x2d)

    if n_pad != n:
        out_flat = out2d.reshape(-1)[:n]
        return out_flat.reshape(orig_shape)
    return out2d.reshape(orig_shape)


class ClampModule:
    """JAX/Pallas equivalent of mmcv's Clamp activation layer."""

    def __init__(self, min=-1.0, max=1.0):
        self.min = min
        self.max = max

    def __call__(self, x):
        # TODO(synk): in production, fall back to jnp.clip below ~1 MB where
        # kernel-launch overhead dominates; always use the Pallas path here.
        return clamp_pallas(x, self.min, self.max)


if __name__ == "__main__":
    key = jax.random.PRNGKey(0)
    clamp = ClampModule(min=-1.0, max=1.0)

    # 1) Small NCHW input (padding-free path, single lane-dense block).
    k0, k1, k2, k3 = jax.random.split(key, 4)
    x0 = jax.random.normal(k0, (2, 4, 16, 16), dtype=jnp.float32) * 3.0
    y0 = jax.block_until_ready(clamp(x0))
    assert y0.shape == x0.shape and y0.dtype == x0.dtype
    assert jnp.allclose(y0, jnp.clip(x0, -1.0, 1.0))

    # 2) Awkward shape -> exercises the pad + ragged path.
    x1 = jax.random.normal(k1, (3, 5, 7, 11), dtype=jnp.float32) * 3.0
    y1 = jax.block_until_ready(clamp(x1))
    assert y1.shape == x1.shape and y1.dtype == x1.dtype
    assert jnp.allclose(y1, jnp.clip(x1, -1.0, 1.0))

    # 3) bf16 input -> checks the clip stays in bf16 (weak-typed bounds).
    x2 = (jax.random.normal(k2, (4, 8, 24, 24), dtype=jnp.float32) * 3.0).astype(
        jnp.bfloat16
    )
    y2 = jax.block_until_ready(clamp(x2))
    assert y2.shape == x2.shape and y2.dtype == x2.dtype
    assert jnp.allclose(
        y2.astype(jnp.float32), jnp.clip(x2, -1.0, 1.0).astype(jnp.float32)
    )

    # 4) Larger tensor -> exercises the multi-block (>=2 grid steps) tiled path.
    x3 = jax.random.normal(k3, (8, 64, 64, 64), dtype=jnp.float32) * 3.0
    y3 = jax.block_until_ready(clamp(x3))
    assert y3.shape == x3.shape and y3.dtype == x3.dtype
    assert jnp.allclose(y3, jnp.clip(x3, -1.0, 1.0))

    print("KERNEL_OK")
</pallas_src>

<mosaic_0001>
module attributes {stable_mosaic.version = 11 : i64} {
  func.func @_clamp_kernel(%arg0: i32, %arg1: memref<1x2048xf32, #tpu.memory_space<vmem>>, %arg2: memref<1x2048xf32, #tpu.memory_space<vmem>>) attributes {dimension_semantics = [#tpu.dimension_semantics<parallel>], iteration_bounds = array<i64: 1>, scalar_prefetch = 0 : i64, scratch_operands = 0 : i64, tpu.core_type = #tpu.core_type<tc>, window_params = [{transform_indices = @transform_0, window_bounds = array<i64: 1, 2048>}, {transform_indices = @transform_1, window_bounds = array<i64: 1, 2048>}]} {
    %c0 = arith.constant 0 : index
    %c0_0 = arith.constant 0 : index
    %0 = vector.load %arg1[%c0, %c0_0] : memref<1x2048xf32, #tpu.memory_space<vmem>>, vector<1x2048xf32>
    %cst = arith.constant -1.000000e+00 : f32
    %cst_1 = arith.constant 1.000000e+00 : f32
    %1 = vector.broadcast %cst : f32 to vector<1x2048xf32>
    %2 = arith.maximumf %1, %0 : vector<1x2048xf32>
    %3 = vector.broadcast %cst_1 : f32 to vector<1x2048xf32>
    %4 = arith.minimumf %3, %2 : vector<1x2048xf32>
    %c0_2 = arith.constant 0 : index
    %c0_3 = arith.constant 0 : index
    %5 = vector.load %arg2[%c0_2, %c0_3] : memref<1x2048xf32, #tpu.memory_space<vmem>>, vector<1x2048xf32>
    tpu.vector_store %arg2[%c0_2, %c0_3], %4 {strides = array<i32>} : memref<1x2048xf32, #tpu.memory_space<vmem>>, vector<1x2048xf32>,
    return
  }
  func.func @transform_0(%arg0: i32) -> (i32, i32) {
    %c0_i32 = arith.constant 0 : i32
    %c0_i32_0 = arith.constant 0 : i32
    return %arg0, %c0_i32 : i32, i32
  }
  func.func @transform_1(%arg0: i32) -> (i32, i32) {
    %c0_i32 = arith.constant 0 : i32
    %c0_i32_0 = arith.constant 0 : i32
    return %arg0, %c0_i32 : i32, i32
  }
}

</mosaic_0001>

<llo_original>
// kernel: tpu_custom_call.1
$region0: #{tpu_custom_call.1}
  #allocation0 [shape = 'u32[]', space=smem, size = 0x4, offset = 0x4, fixed_abs, tag = 'smem constant byte address 0x4 - core index']
  #allocation1 [shape = 'u32[144,128]{1,0:T(1,128)}', space=vmem, size = 0x12000, scoped, tag = 'internal scratch']
  %s0 = inlined_call_operand.hbm [shape: f32[1,2048], index: 0, kind: input, shape index: {}]
  %s1 = inlined_call_operand.hbm [shape: f32[1,2048], index: 1, kind: output, shape index: {}]
  %s2 = sld [smem:[#allocation0]]
  $region18: #{tpu_custom_call.1} parent=0
    _
  %s4 = ssub.s32 1, %s2
  %s5 = scalar_select 0, %s4, %s2
  $region1: #{tpu_custom_call.1} parent=0
    #allocation2 [shape = 'u8[8192]{0}', space=vmem, size = 0x2000, scoped, tag = 'input window, operand 0, single buffered']
    #allocation3 [shape = 's32[1]{0}', space=sflag, size = 0x4, scoped, tag = 'scoped memory for tpu_custom_call.1']
    #allocation4 [shape = 's32[1]{0}', space=sflag, size = 0x4, scoped, tag = 'scoped memory for tpu_custom_call.1']
    #allocation5 [shape = 'u8[8192]{0}', space=vmem, size = 0x2000, scoped, tag = 'output window, operand 0, single buffered']
    %6 = vsyncpa [#allocation3], 0
    %7 = vsyncpa [#allocation4], 0
    // Predicated region
    $region2: #{tpu_custom_call.1} parent=1 // pred_check
      _
    $region3: #{tpu_custom_call.1} parent=1 // pred_check_branch
      %9 = sbr.rel (0) target = $region5
    $region4: #{tpu_custom_call.1} parent=1 // pred_region
      %s11 = ssub.s32 256, 256
      %12 = vsyncadd [#allocation3], %s11
      %s14 = sshll.u32 [#allocation2], 4
      %s15 = int_to_ptr.vmem [resolvable:$true] %s14
      %17 = dma.hbm_to_vmem [thread:$0]  %s0, 256, %s15, [#allocation3]
    $region5: #{tpu_custom_call.1} parent=1 // pred_fallthru
      _
    // Predicated region
    $region6: #{tpu_custom_call.1} parent=1 // pred_check
      _
    $region7: #{tpu_custom_call.1} parent=1 // pred_check_branch
      %19 = sbr.rel (0) target = $region9
    $region8: #{tpu_custom_call.1} parent=1 // pred_region
      %20 = dma.done [#allocation3], 256
    $region9: #{tpu_custom_call.1} parent=1 // pred_fallthru
      _
    %v21 = vld [vmem:[#allocation2] sm:$0xff]
    %v22 = vld [vmem:[#allocation2 + $0x8] sm:$0xff]
    %v23 = vmax.f32 %v21, -1.0
    %v24 = vmax.f32 %v22, -1.0
    %v25 = vmin.f32 %v23, 1.0
    %v26 = vmin.f32 %v24, 1.0
    %27 = vst [vmem:[#allocation5] sm:$0xff] %v25
    %28 = vst [vmem:[#allocation5 + $0x8] sm:$0xff] %v26
    // Predicated region
    $region10: #{tpu_custom_call.1} parent=1 // pred_check
      _
    $region11: #{tpu_custom_call.1} parent=1 // pred_check_branch
      %30 = sbr.rel (0) target = $region13
    $region12: #{tpu_custom_call.1} parent=1 // pred_region
      %s32 = ssub.s32 256, 256
      %33 = vsyncadd [#allocation4], %s32
      %s35 = sshll.u32 [#allocation5], 4
      %s36 = int_to_ptr.vmem [resolvable:$true] %s35
      %38 = dma.vmem_to_hbm [thread:$0]  %s36, 256, %s1, [#allocation4]
    $region13: #{tpu_custom_call.1} parent=1 // pred_fallthru
      _
    // Predicated region
    $region14: #{tpu_custom_call.1} parent=1 // pred_check
      _
    $region15: #{tpu_custom_call.1} parent=1 // pred_check_branch
      %40 = sbr.rel (0) target = $region17
    $region16: #{tpu_custom_call.1} parent=1 // pred_region
      %41 = dma.done [#allocation4], 256
    $region17: #{tpu_custom_call.1} parent=1 // pred_fallthru
      _
    %42 = vsyncpa [#allocation3], 1
    %43 = vsyncpa [#allocation4], 1

</llo_original>
